<compile_context>
chip_gen: v5e
topology: v5e:2x2
jax: 0.10.0
libtpu: 0.0.40
codegen_flags: <defaults>
</compile_context>

<pallas_src>
import functools
import math

import jax
import jax.numpy as jnp
from jax.experimental import pallas as pl
from jax.experimental.pallas import tpu as pltpu


def mha_kernel(q_ref, k_ref, v_ref, mask_ref,
               wq_ref, bq_ref, wk_ref, bk_ref, wv_ref, bv_ref,
               wo_ref, bo_ref, o_ref,
               acc_ref, kc_ref, vc_ref, *, d_k):
    qi = pl.program_id(1)
    h = pl.program_id(2)
    n_head = pl.num_programs(2)

    @pl.when(h == 0)
    def _():
        acc_ref[...] = jnp.zeros_like(acc_ref)

    # Per-(batch, head) K/V projections: computed at the first query tile of
    # each batch and cached in VMEM for all remaining query tiles.
    @pl.when(qi == 0)
    def _():
        k_in = k_ref[0]                                           # (T2, F) bf16
        v_in = v_ref[0]
        kh = jnp.dot(k_in, wk_ref[h],
                     preferred_element_type=jnp.float32) + bk_ref[h]
        vh = jnp.dot(v_in, wv_ref[h],
                     preferred_element_type=jnp.float32) + bv_ref[h]
        kc_ref[h] = kh.astype(jnp.bfloat16)                       # (T2, d_k)
        vc_ref[h] = vh.astype(jnp.bfloat16)

    # Query projection for this head / this query tile (f32 accum + bias),
    # with the 1/sqrt(d_k) score scale folded in before the bf16 cast.
    q_in = q_ref[0]                                               # (tq, F) bf16
    qh = jnp.dot(q_in, wq_ref[h],
                 preferred_element_type=jnp.float32) + bq_ref[h]
    qh = qh * jnp.float32(1.0 / math.sqrt(d_k))                   # (tq, d_k) f32

    kh = kc_ref[h]                                                # (T2, d_k) bf16
    vh = vc_ref[h]                                                # (T2, d_k) bf16

    # Scores: contract the shared d_k axis directly (no k^T materialization).
    s = jax.lax.dot_general(
        qh.astype(jnp.bfloat16), kh,
        (((1,), (1,)), ((), ())),
        preferred_element_type=jnp.float32)                       # (tq, T2) f32

    # Mask semantics match PyTorch .eq(0): masked_fill(min) before softmax,
    # masked_fill(0.0) after softmax (exact, including fully-masked rows).
    masked = (mask_ref[0] == 0)                                   # (1|tq, T2) bool
    min_value = jnp.float32(jnp.finfo(jnp.float32).min)
    s = jnp.where(masked, min_value, s)

    m = jnp.max(s, axis=-1, keepdims=True)
    e = jnp.exp(s - m)
    denom = jnp.sum(e, axis=-1, keepdims=True)
    p = jnp.where(masked, jnp.float32(0.0), e)
    # dropout: eval mode -> identity

    ctx = jnp.dot(p.astype(jnp.bfloat16), vh,
                  preferred_element_type=jnp.float32)             # (tq, d_k) f32
    ctx = ctx * pl.reciprocal(denom, approx=True)                 # EUP reciprocal

    # This head's slice of the output projection, accumulated over heads.
    acc_ref[...] += jnp.dot(ctx.astype(jnp.bfloat16), wo_ref[h],
                            preferred_element_type=jnp.float32)

    @pl.when(h == n_head - 1)
    def _():
        o_ref[0] = (acc_ref[...] + bo_ref[...]).astype(o_ref.dtype)


def multi_headed_attention(query, key, value, mask, params, n_head):
    """query: (B,T1,F), key/value: (B,T2,F) float32; mask: (B,1,T2) or (B,T1,T2)
    int (0 = masked out), or None."""
    B, T1, F = query.shape
    T2 = key.shape[1]
    assert F % n_head == 0
    d_k = F // n_head

    (wq, bq), (wk, bk), (wv, bv), (wo, bo) = params

    # PyTorch Linear weight is (out, in): y = x @ W.T + b.  Pre-transpose to
    # (in, out) and split the head-major output columns into a leading head
    # axis so the kernel never slices the lane axis.  Weights go to bf16 for
    # the MXU; biases stay f32 (added after f32 accumulation).
    def split_qkv_weight(w):                       # (out,in) -> (H, F, d_k) bf16
        w_t = w.T.reshape(F, n_head, d_k)          # columns are head-major h*d_k+d
        return jnp.transpose(w_t, (1, 0, 2)).astype(jnp.bfloat16)

    wq_h = split_qkv_weight(wq)
    wk_h = split_qkv_weight(wk)
    wv_h = split_qkv_weight(wv)
    bq_h = bq.reshape(n_head, 1, d_k).astype(jnp.float32)
    bk_h = bk.reshape(n_head, 1, d_k).astype(jnp.float32)
    bv_h = bv.reshape(n_head, 1, d_k).astype(jnp.float32)

    # Output projection: y = ctx @ wo.T; split wo.T rows (d_k rows per head).
    wo_h = wo.T.reshape(n_head, d_k, F).astype(jnp.bfloat16)      # (H, d_k, F)
    bo_2 = bo.reshape(1, F).astype(jnp.float32)

    # bf16 activations into the kernel (halves HBM traffic; MXU is bf16-native).
    q_bf = query.astype(jnp.bfloat16)
    k_bf = key.astype(jnp.bfloat16)
    v_bf = value.astype(jnp.bfloat16)

    if mask is None:
        mask = jnp.ones((B, 1, T2), jnp.int32)
    mask_i = mask.astype(jnp.int32)

    # Query-time tiling (bounds VMEM / score size; full tile for short seqs).
    if T1 % 256 == 0:
        tq = 256
    elif T1 % 128 == 0:
        tq = 128
    else:
        tq = T1
    grid = (B, T1 // tq, n_head)

    # Mask may be (B, 1, T2) or (B, T1, T2); broadcast handled in-kernel.
    if mask_i.shape[1] == 1:
        mask_spec = pl.BlockSpec((1, 1, T2), lambda b, qi, h: (b, 0, 0))
    else:
        mask_spec = pl.BlockSpec((1, tq, T2), lambda b, qi, h: (b, qi, 0))

    kernel = functools.partial(mha_kernel, d_k=d_k)

    return pl.pallas_call(
        kernel,
        out_shape=jax.ShapeDtypeStruct((B, T1, F), jnp.float32),
        grid_spec=pltpu.PrefetchScalarGridSpec(
            num_scalar_prefetch=0,
            grid=grid,
            in_specs=[
                pl.BlockSpec((1, tq, F), lambda b, qi, h: (b, qi, 0)),       # query tile
                pl.BlockSpec((1, T2, F), lambda b, qi, h: (b, 0, 0)),        # key (per batch)
                pl.BlockSpec((1, T2, F), lambda b, qi, h: (b, 0, 0)),        # value (per batch)
                mask_spec,                                                   # mask
                pl.BlockSpec((n_head, F, d_k), lambda b, qi, h: (0, 0, 0)),  # wq (all heads)
                pl.BlockSpec((n_head, 1, d_k), lambda b, qi, h: (0, 0, 0)),  # bq
                pl.BlockSpec((n_head, F, d_k), lambda b, qi, h: (0, 0, 0)),  # wk
                pl.BlockSpec((n_head, 1, d_k), lambda b, qi, h: (0, 0, 0)),  # bk
                pl.BlockSpec((n_head, F, d_k), lambda b, qi, h: (0, 0, 0)),  # wv
                pl.BlockSpec((n_head, 1, d_k), lambda b, qi, h: (0, 0, 0)),  # bv
                pl.BlockSpec((n_head, d_k, F), lambda b, qi, h: (0, 0, 0)),  # wo
                pl.BlockSpec((1, F), lambda b, qi, h: (0, 0)),               # bo
            ],
            out_specs=pl.BlockSpec((1, tq, F), lambda b, qi, h: (b, qi, 0)),
            scratch_shapes=[
                pltpu.VMEM((tq, F), jnp.float32),               # output accumulator
                pltpu.VMEM((n_head, T2, d_k), jnp.bfloat16),    # cached K head projections
                pltpu.VMEM((n_head, T2, d_k), jnp.bfloat16),    # cached V head projections
            ],
        ),
        compiler_params=pltpu.CompilerParams(
            dimension_semantics=("parallel", "arbitrary", "arbitrary")),
    )(q_bf, k_bf, v_bf, mask_i,
      wq_h, bq_h, wk_h, bk_h, wv_h, bv_h, wo_h, bo_2)


def _reference(query, key, value, mask, params, n_head):
    """Pure-JAX f32 reference replicating the PyTorch forward pass."""
    B, T1, F = query.shape
    d_k = F // n_head
    (wq, bq), (wk, bk), (wv, bv), (wo, bo) = params

    def lin(x, w, b):
        return x @ w.T + b

    q = lin(query, wq, bq).reshape(B, -1, n_head, d_k).transpose(0, 2, 1, 3)
    k = lin(key, wk, bk).reshape(B, -1, n_head, d_k).transpose(0, 2, 1, 3)
    v = lin(value, wv, bv).reshape(B, -1, n_head, d_k).transpose(0, 2, 1, 3)

    scores = jnp.einsum("bhqd,bhkd->bhqk", q, k) / math.sqrt(d_k)
    m = (mask[:, None, :, :] == 0)                    # (B,1,1|T1,T2)
    scores = jnp.where(m, jnp.finfo(jnp.float32).min, scores)
    attn = jax.nn.softmax(scores, axis=-1)
    attn = jnp.where(m, 0.0, attn)
    x = jnp.einsum("bhqk,bhkd->bhqd", attn, v)
    x = x.transpose(0, 2, 1, 3).reshape(B, -1, n_head * d_k)
    return lin(x, wo, bo)


if __name__ == "__main__":
    B, T, F, H = 2, 8, 32, 4
    key0 = jax.random.PRNGKey(0)
    keys = jax.random.split(key0, 12)

    scale = 1.0 / math.sqrt(F)
    params = (
        (jax.random.uniform(keys[0], (F, F), jnp.float32, -scale, scale),
         jax.random.uniform(keys[1], (F,), jnp.float32, -scale, scale)),
        (jax.random.uniform(keys[2], (F, F), jnp.float32, -scale, scale),
         jax.random.uniform(keys[3], (F,), jnp.float32, -scale, scale)),
        (jax.random.uniform(keys[4], (F, F), jnp.float32, -scale, scale),
         jax.random.uniform(keys[5], (F,), jnp.float32, -scale, scale)),
        (jax.random.uniform(keys[6], (F, F), jnp.float32, -scale, scale),
         jax.random.uniform(keys[7], (F,), jnp.float32, -scale, scale)),
    )

    query = jax.random.normal(keys[8], (B, T, F), jnp.float32)
    key_t = jax.random.normal(keys[9], (B, T, F), jnp.float32)
    value = jax.random.normal(keys[10], (B, T, F), jnp.float32)

    # mask: (B, 1, T2), 1 = keep, 0 = masked out (last 2 frames of batch 1 masked)
    mask = jnp.ones((B, 1, T), jnp.int32)
    mask = mask.at[1, 0, -2:].set(0)

    out = multi_headed_attention(query, key_t, value, mask, params, H)
    out = jax.block_until_ready(out)

    ref = _reference(query, key_t, value, mask, params, H)
    assert out.shape == (B, T, F)
    # bf16 MXU operands + approx reciprocal vs f32 reference -> looser tolerance.
    assert jnp.allclose(out, ref, atol=3e-2, rtol=3e-2), "mismatch vs pure-JAX reference"

    print("KERNEL_OK")
</pallas_src>

<mosaic_0001>
module attributes {stable_mosaic.version = 11 : i64} {
  func.func @mha_kernel(%arg0: i32, %arg1: i32, %arg2: i32, %arg3: memref<1x8x32xbf16, #tpu.memory_space<vmem>>, %arg4: memref<1x8x32xbf16, #tpu.memory_space<vmem>>, %arg5: memref<1x8x32xbf16, #tpu.memory_space<vmem>>, %arg6: memref<1x1x8xi32, #tpu.memory_space<vmem>>, %arg7: memref<4x32x8xbf16, #tpu.memory_space<vmem>>, %arg8: memref<4x1x8xf32, #tpu.memory_space<vmem>>, %arg9: memref<4x32x8xbf16, #tpu.memory_space<vmem>>, %arg10: memref<4x1x8xf32, #tpu.memory_space<vmem>>, %arg11: memref<4x32x8xbf16, #tpu.memory_space<vmem>>, %arg12: memref<4x1x8xf32, #tpu.memory_space<vmem>>, %arg13: memref<4x8x32xbf16, #tpu.memory_space<vmem>>, %arg14: memref<1x32xf32, #tpu.memory_space<vmem>>, %arg15: memref<1x8x32xf32, #tpu.memory_space<vmem>>, %arg16: memref<8x32xf32, #tpu.memory_space<vmem>>, %arg17: memref<4x8x8xbf16, #tpu.memory_space<vmem>>, %arg18: memref<4x8x8xbf16, #tpu.memory_space<vmem>>) attributes {dimension_semantics = [#tpu.dimension_semantics<parallel>, #tpu.dimension_semantics<arbitrary>, #tpu.dimension_semantics<arbitrary>], iteration_bounds = array<i64: 2, 1, 4>, scalar_prefetch = 0 : i64, scratch_operands = 3 : i64, tpu.core_type = #tpu.core_type<tc>, window_params = [{transform_indices = @transform_0, window_bounds = array<i64: 1, 8, 32>}, {transform_indices = @transform_1, window_bounds = array<i64: 1, 8, 32>}, {transform_indices = @transform_2, window_bounds = array<i64: 1, 8, 32>}, {transform_indices = @transform_3, window_bounds = array<i64: 1, 1, 8>}, {pipeline_mode = #tpu.pipeline_mode<synchronous>, transform_indices = @transform_4, window_bounds = array<i64: 4, 32, 8>}, {pipeline_mode = #tpu.pipeline_mode<synchronous>, transform_indices = @transform_5, window_bounds = array<i64: 4, 1, 8>}, {pipeline_mode = #tpu.pipeline_mode<synchronous>, transform_indices = @transform_6, window_bounds = array<i64: 4, 32, 8>}, {pipeline_mode = #tpu.pipeline_mode<synchronous>, transform_indices = @transform_7, window_bounds = array<i64: 4, 1, 8>}, {pipeline_mode = #tpu.pipeline_mode<synchronous>, transform_indices = @transform_8, window_bounds = array<i64: 4, 32, 8>}, {pipeline_mode = #tpu.pipeline_mode<synchronous>, transform_indices = @transform_9, window_bounds = array<i64: 4, 1, 8>}, {pipeline_mode = #tpu.pipeline_mode<synchronous>, transform_indices = @transform_10, window_bounds = array<i64: 4, 8, 32>}, {pipeline_mode = #tpu.pipeline_mode<synchronous>, transform_indices = @transform_11, window_bounds = array<i64: 1, 32>}, {transform_indices = @transform_12, window_bounds = array<i64: 1, 8, 32>}]} {
    %c0_i32 = arith.constant 0 : i32
    %0 = arith.cmpi eq, %arg2, %c0_i32 : i32
    %1 = arith.extui %0 : i1 to i32
    %c0_i32_0 = arith.constant 0 : i32
    %2 = arith.cmpi ne, %1, %c0_i32_0 : i32
    scf.if %2 {
      %cst_32 = arith.constant 0.000000e+00 : f32
      %62 = vector.broadcast %cst_32 : f32 to vector<8x32xf32>
      %c0_33 = arith.constant 0 : index
      %c0_34 = arith.constant 0 : index
      %63 = vector.load %arg16[%c0_33, %c0_34] : memref<8x32xf32, #tpu.memory_space<vmem>>, vector<8x32xf32>
      tpu.vector_store %arg16[%c0_33, %c0_34], %62 {strides = array<i32>} : memref<8x32xf32, #tpu.memory_space<vmem>>, vector<8x32xf32>,
    } else {
    }
    %c0_i32_1 = arith.constant 0 : i32
    %3 = arith.cmpi eq, %arg1, %c0_i32_1 : i32
    %4 = arith.extui %3 : i1 to i32
    %c0_i32_2 = arith.constant 0 : i32
    %5 = arith.cmpi ne, %4, %c0_i32_2 : i32
    scf.if %5 {
      %c0_32 = arith.constant 0 : index
      %c0_33 = arith.constant 0 : index
      %c0_34 = arith.constant 0 : index
      %62 = vector.load %arg4[%c0_32, %c0_33, %c0_34] : memref<1x8x32xbf16, #tpu.memory_space<vmem>>, vector<1x8x32xbf16>
      %63 = vector.shape_cast %62 : vector<1x8x32xbf16> to vector<8x32xbf16>
      %c0_35 = arith.constant 0 : index
      %c0_36 = arith.constant 0 : index
      %c0_37 = arith.constant 0 : index
      %64 = vector.load %arg5[%c0_35, %c0_36, %c0_37] : memref<1x8x32xbf16, #tpu.memory_space<vmem>>, vector<1x8x32xbf16>
      %65 = vector.shape_cast %64 : vector<1x8x32xbf16> to vector<8x32xbf16>
      %66 = arith.index_cast %arg2 : i32 to index
      %c0_38 = arith.constant 0 : index
      %c0_39 = arith.constant 0 : index
      %67 = vector.load %arg9[%66, %c0_38, %c0_39] : memref<4x32x8xbf16, #tpu.memory_space<vmem>>, vector<1x32x8xbf16>
      %68 = vector.shape_cast %67 : vector<1x32x8xbf16> to vector<32x8xbf16>
      %cst_40 = arith.constant dense<0.000000e+00> : vector<8x8xf32>
      %69 = tpu.matmul %63, %68, %cst_40 {dimension_numbers = #tpu.dot_dimension_numbers<[1], [0], [0], [1], [0, 0, 1, 1], [], []>} : vector<8x32xbf16>, vector<32x8xbf16>, vector<8x8xf32> -> vector<8x8xf32>
      %70 = arith.index_cast %arg2 : i32 to index
      %c0_41 = arith.constant 0 : index
      %c0_42 = arith.constant 0 : index
      %71 = vector.load %arg10[%70, %c0_41, %c0_42] : memref<4x1x8xf32, #tpu.memory_space<vmem>>, vector<1x1x8xf32>
      %72 = vector.shape_cast %71 : vector<1x1x8xf32> to vector<1x8xf32>
      %73 = vector.broadcast %72 : vector<1x8xf32> to vector<8x8xf32>
      %74 = arith.addf %69, %73 : vector<8x8xf32>
      %75 = arith.index_cast %arg2 : i32 to index
      %c0_43 = arith.constant 0 : index
      %c0_44 = arith.constant 0 : index
      %76 = vector.load %arg11[%75, %c0_43, %c0_44] : memref<4x32x8xbf16, #tpu.memory_space<vmem>>, vector<1x32x8xbf16>
      %77 = vector.shape_cast %76 : vector<1x32x8xbf16> to vector<32x8xbf16>
      %cst_45 = arith.constant dense<0.000000e+00> : vector<8x8xf32>
      %78 = tpu.matmul %65, %77, %cst_45 {dimension_numbers = #tpu.dot_dimension_numbers<[1], [0], [0], [1], [0, 0, 1, 1], [], []>} : vector<8x32xbf16>, vector<32x8xbf16>, vector<8x8xf32> -> vector<8x8xf32>
      %79 = arith.index_cast %arg2 : i32 to index
      %c0_46 = arith.constant 0 : index
      %c0_47 = arith.constant 0 : index
      %80 = vector.load %arg12[%79, %c0_46, %c0_47] : memref<4x1x8xf32, #tpu.memory_space<vmem>>, vector<1x1x8xf32>
      %81 = vector.shape_cast %80 : vector<1x1x8xf32> to vector<1x8xf32>
      %82 = vector.broadcast %81 : vector<1x8xf32> to vector<8x8xf32>
      %83 = arith.addf %78, %82 : vector<8x8xf32>
      %84 = arith.truncf %74 : vector<8x8xf32> to vector<8x8xbf16>
      %85 = arith.index_cast %arg2 : i32 to index
      %c0_48 = arith.constant 0 : index
      %c0_49 = arith.constant 0 : index
      %86 = vector.load %arg17[%85, %c0_48, %c0_49] : memref<4x8x8xbf16, #tpu.memory_space<vmem>>, vector<1x8x8xbf16>
      %87 = vector.shape_cast %86 : vector<1x8x8xbf16> to vector<8x8xbf16>
      %88 = vector.shape_cast %84 : vector<8x8xbf16> to vector<1x8x8xbf16>
      tpu.vector_store %arg17[%85, %c0_48, %c0_49], %88 {strides = array<i32>} : memref<4x8x8xbf16, #tpu.memory_space<vmem>>, vector<1x8x8xbf16>,
      %89 = arith.truncf %83 : vector<8x8xf32> to vector<8x8xbf16>
      %90 = arith.index_cast %arg2 : i32 to index
      %c0_50 = arith.constant 0 : index
      %c0_51 = arith.constant 0 : index
      %91 = vector.load %arg18[%90, %c0_50, %c0_51] : memref<4x8x8xbf16, #tpu.memory_space<vmem>>, vector<1x8x8xbf16>
      %92 = vector.shape_cast %91 : vector<1x8x8xbf16> to vector<8x8xbf16>
      %93 = vector.shape_cast %89 : vector<8x8xbf16> to vector<1x8x8xbf16>
      tpu.vector_store %arg18[%90, %c0_50, %c0_51], %93 {strides = array<i32>} : memref<4x8x8xbf16, #tpu.memory_space<vmem>>, vector<1x8x8xbf16>,
    } else {
    }
    %c0 = arith.constant 0 : index
    %c0_3 = arith.constant 0 : index
    %c0_4 = arith.constant 0 : index
    %6 = vector.load %arg3[%c0, %c0_3, %c0_4] : memref<1x8x32xbf16, #tpu.memory_space<vmem>>, vector<1x8x32xbf16>
    %7 = vector.shape_cast %6 : vector<1x8x32xbf16> to vector<8x32xbf16>
    %8 = arith.index_cast %arg2 : i32 to index
    %c0_5 = arith.constant 0 : index
    %c0_6 = arith.constant 0 : index
    %9 = vector.load %arg7[%8, %c0_5, %c0_6] : memref<4x32x8xbf16, #tpu.memory_space<vmem>>, vector<1x32x8xbf16>
    %10 = vector.shape_cast %9 : vector<1x32x8xbf16> to vector<32x8xbf16>
    %cst = arith.constant dense<0.000000e+00> : vector<8x8xf32>
    %11 = tpu.matmul %7, %10, %cst {dimension_numbers = #tpu.dot_dimension_numbers<[1], [0], [0], [1], [0, 0, 1, 1], [], []>} : vector<8x32xbf16>, vector<32x8xbf16>, vector<8x8xf32> -> vector<8x8xf32>
    %12 = arith.index_cast %arg2 : i32 to index
    %c0_7 = arith.constant 0 : index
    %c0_8 = arith.constant 0 : index
    %13 = vector.load %arg8[%12, %c0_7, %c0_8] : memref<4x1x8xf32, #tpu.memory_space<vmem>>, vector<1x1x8xf32>
    %14 = vector.shape_cast %13 : vector<1x1x8xf32> to vector<1x8xf32>
    %15 = vector.broadcast %14 : vector<1x8xf32> to vector<8x8xf32>
    %16 = arith.addf %11, %15 : vector<8x8xf32>
    %cst_9 = arith.constant 0.353553385 : f32
    %17 = vector.broadcast %cst_9 : f32 to vector<8x8xf32>
    %18 = arith.mulf %16, %17 : vector<8x8xf32>
    %19 = arith.index_cast %arg2 : i32 to index
    %c0_10 = arith.constant 0 : index
    %c0_11 = arith.constant 0 : index
    %20 = vector.load %arg17[%19, %c0_10, %c0_11] : memref<4x8x8xbf16, #tpu.memory_space<vmem>>, vector<1x8x8xbf16>
    %21 = vector.shape_cast %20 : vector<1x8x8xbf16> to vector<8x8xbf16>
    %22 = arith.index_cast %arg2 : i32 to index
    %c0_12 = arith.constant 0 : index
    %c0_13 = arith.constant 0 : index
    %23 = vector.load %arg18[%22, %c0_12, %c0_13] : memref<4x8x8xbf16, #tpu.memory_space<vmem>>, vector<1x8x8xbf16>
    %24 = vector.shape_cast %23 : vector<1x8x8xbf16> to vector<8x8xbf16>
    %25 = arith.truncf %18 : vector<8x8xf32> to vector<8x8xbf16>
    %cst_14 = arith.constant dense<0.000000e+00> : vector<8x8xf32>
    %26 = tpu.matmul %25, %21, %cst_14 {dimension_numbers = #tpu.dot_dimension_numbers<[1], [1], [0], [0], [0, 0, 1, 0], [], []>} : vector<8x8xbf16>, vector<8x8xbf16>, vector<8x8xf32> -> vector<8x8xf32>
    %c0_15 = arith.constant 0 : index
    %c0_16 = arith.constant 0 : index
    %c0_17 = arith.constant 0 : index
    %27 = vector.load %arg6[%c0_15, %c0_16, %c0_17] : memref<1x1x8xi32, #tpu.memory_space<vmem>>, vector<1x1x8xi32>
    %28 = vector.shape_cast %27 : vector<1x1x8xi32> to vector<1x8xi32>
    %c0_i32_18 = arith.constant 0 : i32
    %29 = vector.broadcast %c0_i32_18 : i32 to vector<1x8xi32>
    %30 = arith.cmpi eq, %28, %29 : vector<1x8xi32>
    %cst_19 = arith.constant -3.40282347E+38 : f32
    %31 = vector.shape_cast %30 : vector<1x8xi1> to vector<1x8xi1>
    %32 = vector.broadcast %31 : vector<1x8xi1> to vector<8x8xi1>
    %33 = vector.broadcast %cst_19 : f32 to vector<8x8xf32>
    %34 = arith.select %32, %33, %26 : vector<8x8xi1>, vector<8x8xf32>
    %cst_20 = arith.constant dense<0xFF800000> : vector<8xf32>
    %35 = vector.multi_reduction <maximumf>, %34, %cst_20 [1] : vector<8x8xf32> to vector<8xf32>
    %36 = vector.shape_cast %35 : vector<8xf32> to vector<8x1xf32>
    %37 = vector.broadcast %36 : vector<8x1xf32> to vector<8x8xf32>
    %38 = arith.subf %34, %37 : vector<8x8xf32>
    %39 = math.exp %38 : vector<8x8xf32>
    %cst_21 = arith.constant dense<0.000000e+00> : vector<8xf32>
    %40 = vector.multi_reduction <add>, %39, %cst_21 [1] : vector<8x8xf32> to vector<8xf32>
    %41 = vector.shape_cast %40 : vector<8xf32> to vector<8x1xf32>
    %cst_22 = arith.constant 0.000000e+00 : f32
    %42 = vector.shape_cast %30 : vector<1x8xi1> to vector<1x8xi1>
    %43 = vector.broadcast %42 : vector<1x8xi1> to vector<8x8xi1>
    %44 = vector.broadcast %cst_22 : f32 to vector<8x8xf32>
    %45 = arith.select %43, %44, %39 : vector<8x8xi1>, vector<8x8xf32>
    %46 = arith.truncf %45 : vector<8x8xf32> to vector<8x8xbf16>
    %cst_23 = arith.constant dense<0.000000e+00> : vector<8x8xf32>
    %47 = tpu.matmul %46, %24, %cst_23 {dimension_numbers = #tpu.dot_dimension_numbers<[1], [0], [0], [1], [0, 0, 1, 1], [], []>} : vector<8x8xbf16>, vector<8x8xbf16>, vector<8x8xf32> -> vector<8x8xf32>
    %48 = tpu.reciprocal %41 {approx = true} : vector<8x1xf32> -> vector<8x1xf32>
    %49 = vector.broadcast %48 : vector<8x1xf32> to vector<8x8xf32>
    %50 = arith.mulf %47, %49 : vector<8x8xf32>
    %c0_24 = arith.constant 0 : index
    %c0_25 = arith.constant 0 : index
    %51 = vector.load %arg16[%c0_24, %c0_25] : memref<8x32xf32, #tpu.memory_space<vmem>>, vector<8x32xf32>
    %52 = arith.truncf %50 : vector<8x8xf32> to vector<8x8xbf16>
    %53 = arith.index_cast %arg2 : i32 to index
    %c0_26 = arith.constant 0 : index
    %c0_27 = arith.constant 0 : index
    %54 = vector.load %arg13[%53, %c0_26, %c0_27] : memref<4x8x32xbf16, #tpu.memory_space<vmem>>, vector<1x8x32xbf16>
    %55 = vector.shape_cast %54 : vector<1x8x32xbf16> to vector<8x32xbf16>
    %cst_28 = arith.constant dense<0.000000e+00> : vector<8x32xf32>
    %56 = tpu.matmul %52, %55, %cst_28 {dimension_numbers = #tpu.dot_dimension_numbers<[1], [0], [0], [1], [0, 0, 1, 1], [], []>} : vector<8x8xbf16>, vector<8x32xbf16>, vector<8x32xf32> -> vector<8x32xf32>
    %57 = arith.addf %51, %56 : vector<8x32xf32>
    %c0_29 = arith.constant 0 : index
    %c0_30 = arith.constant 0 : index
    %58 = vector.load %arg16[%c0_29, %c0_30] : memref<8x32xf32, #tpu.memory_space<vmem>>, vector<8x32xf32>
    tpu.vector_store %arg16[%c0_29, %c0_30], %57 {strides = array<i32>} : memref<8x32xf32, #tpu.memory_space<vmem>>, vector<8x32xf32>,
    %c3_i32 = arith.constant 3 : i32
    %59 = arith.cmpi eq, %arg2, %c3_i32 : i32
    %60 = arith.extui %59 : i1 to i32
    %c0_i32_31 = arith.constant 0 : i32
    %61 = arith.cmpi ne, %60, %c0_i32_31 : i32
    scf.if %61 {
      %c0_32 = arith.constant 0 : index
      %c0_33 = arith.constant 0 : index
      %62 = vector.load %arg16[%c0_32, %c0_33] : memref<8x32xf32, #tpu.memory_space<vmem>>, vector<8x32xf32>
      %c0_34 = arith.constant 0 : index
      %c0_35 = arith.constant 0 : index
      %63 = vector.load %arg14[%c0_34, %c0_35] : memref<1x32xf32, #tpu.memory_space<vmem>>, vector<1x32xf32>
      %64 = vector.broadcast %63 : vector<1x32xf32> to vector<8x32xf32>
      %65 = arith.addf %62, %64 : vector<8x32xf32>
      %c0_36 = arith.constant 0 : index
      %c0_37 = arith.constant 0 : index
      %c0_38 = arith.constant 0 : index
      %66 = vector.load %arg15[%c0_36, %c0_37, %c0_38] : memref<1x8x32xf32, #tpu.memory_space<vmem>>, vector<1x8x32xf32>
      %67 = vector.shape_cast %66 : vector<1x8x32xf32> to vector<8x32xf32>
      %68 = vector.shape_cast %65 : vector<8x32xf32> to vector<1x8x32xf32>
      tpu.vector_store %arg15[%c0_36, %c0_37, %c0_38], %68 {strides = array<i32>} : memref<1x8x32xf32, #tpu.memory_space<vmem>>, vector<1x8x32xf32>,
    } else {
    }
    return
  }
  func.func @transform_0(%arg0: i32, %arg1: i32, %arg2: i32) -> (i32, i32, i32) {
    %c0_i32 = arith.constant 0 : i32
    %c0_i32_0 = arith.constant 0 : i32
    return %arg0, %arg1, %c0_i32 : i32, i32, i32
  }
  func.func @transform_1(%arg0: i32, %arg1: i32, %arg2: i32) -> (i32, i32, i32) {
    %c0_i32 = arith.constant 0 : i32
    %c0_i32_0 = arith.constant 0 : i32
    %c0_i32_1 = arith.constant 0 : i32
    return %arg0, %c0_i32, %c0_i32_0 : i32, i32, i32
  }
  func.func @transform_2(%arg0: i32, %arg1: i32, %arg2: i32) -> (i32, i32, i32) {
    %c0_i32 = arith.constant 0 : i32
    %c0_i32_0 = arith.constant 0 : i32
    %c0_i32_1 = arith.constant 0 : i32
    return %arg0, %c0_i32, %c0_i32_0 : i32, i32, i32
  }
  func.func @transform_3(%arg0: i32, %arg1: i32, %arg2: i32) -> (i32, i32, i32) {
    %c0_i32 = arith.constant 0 : i32
    %c0_i32_0 = arith.constant 0 : i32
    %c0_i32_1 = arith.constant 0 : i32
    return %arg0, %c0_i32, %c0_i32_0 : i32, i32, i32
  }
  func.func @transform_4(%arg0: i32, %arg1: i32, %arg2: i32) -> (i32, i32, i32) {
    %c0_i32 = arith.constant 0 : i32
    %c0_i32_0 = arith.constant 0 : i32
    %c0_i32_1 = arith.constant 0 : i32
    %c0_i32_2 = arith.constant 0 : i32
    return %c0_i32, %c0_i32_0, %c0_i32_1 : i32, i32, i32
  }
  func.func @transform_5(%arg0: i32, %arg1: i32, %arg2: i32) -> (i32, i32, i32) {
    %c0_i32 = arith.constant 0 : i32
    %c0_i32_0 = arith.constant 0 : i32
    %c0_i32_1 = arith.constant 0 : i32
    %c0_i32_2 = arith.constant 0 : i32
    return %c0_i32, %c0_i32_0, %c0_i32_1 : i32, i32, i32
  }
  func.func @transform_6(%arg0: i32, %arg1: i32, %arg2: i32) -> (i32, i32, i32) {
    %c0_i32 = arith.constant 0 : i32
    %c0_i32_0 = arith.constant 0 : i32
    %c0_i32_1 = arith.constant 0 : i32
    %c0_i32_2 = arith.constant 0 : i32
    return %c0_i32, %c0_i32_0, %c0_i32_1 : i32, i32, i32
  }
  func.func @transform_7(%arg0: i32, %arg1: i32, %arg2: i32) -> (i32, i32, i32) {
    %c0_i32 = arith.constant 0 : i32
    %c0_i32_0 = arith.constant 0 : i32
    %c0_i32_1 = arith.constant 0 : i32
    %c0_i32_2 = arith.constant 0 : i32
    return %c0_i32, %c0_i32_0, %c0_i32_1 : i32, i32, i32
  }
  func.func @transform_8(%arg0: i32, %arg1: i32, %arg2: i32) -> (i32, i32, i32) {
    %c0_i32 = arith.constant 0 : i32
    %c0_i32_0 = arith.constant 0 : i32
    %c0_i32_1 = arith.constant 0 : i32
    %c0_i32_2 = arith.constant 0 : i32
    return %c0_i32, %c0_i32_0, %c0_i32_1 : i32, i32, i32
  }
  func.func @transform_9(%arg0: i32, %arg1: i32, %arg2: i32) -> (i32, i32, i32) {
    %c0_i32 = arith.constant 0 : i32
    %c0_i32_0 = arith.constant 0 : i32
    %c0_i32_1 = arith.constant 0 : i32
    %c0_i32_2 = arith.constant 0 : i32
    return %c0_i32, %c0_i32_0, %c0_i32_1 : i32, i32, i32
  }
  func.func @transform_10(%arg0: i32, %arg1: i32, %arg2: i32) -> (i32, i32, i32) {
    %c0_i32 = arith.constant 0 : i32
    %c0_i32_0 = arith.constant 0 : i32
    %c0_i32_1 = arith.constant 0 : i32
    %c0_i32_2 = arith.constant 0 : i32
    return %c0_i32, %c0_i32_0, %c0_i32_1 : i32, i32, i32
  }
  func.func @transform_11(%arg0: i32, %arg1: i32, %arg2: i32) -> (i32, i32) {
    %c0_i32 = arith.constant 0 : i32
    %c0_i32_0 = arith.constant 0 : i32
    %c0_i32_1 = arith.constant 0 : i32
    return %c0_i32, %c0_i32_0 : i32, i32
  }
  func.func @transform_12(%arg0: i32, %arg1: i32, %arg2: i32) -> (i32, i32, i32) {
    %c0_i32 = arith.constant 0 : i32
    %c0_i32_0 = arith.constant 0 : i32
    return %arg0, %arg1, %c0_i32 : i32, i32, i32
  }
}

</mosaic_0001>

<llo_original>
// kernel: tpu_custom_call.1
$region0: #{tpu_custom_call.1}
  #allocation0 [shape = 'u32[]', space=smem, size = 0x4, offset = 0x4, fixed_abs, tag = 'smem constant byte address 0x4 - core index']
  #allocation1 [shape = 'u32[72,128]{1,0:T(1,128)}', space=vmem, size = 0x9000, scoped, tag = 'internal scratch']
  #allocation2 [shape = 'f32[8,32]{1,0:T(8,128)}', space=vmem, size = 0x1000, scoped, tag = 'scratch operand']
  #allocation3 [shape = 'bf16[4,8,8]{2,1,0:T(8,128)(2,1)}', space=vmem, size = 0x2000, scoped, tag = 'scratch operand']
  #allocation4 [shape = 'bf16[4,8,8]{2,1,0:T(8,128)(2,1)}', space=vmem, size = 0x2000, scoped, tag = 'scratch operand']
  %s0 = inlined_call_operand.vmem [shape: bf16[2,8,32], index: 0, kind: input, shape index: {}]
  %s1 = inlined_call_operand.vmem [shape: bf16[2,8,32], index: 1, kind: input, shape index: {}]
  %s2 = inlined_call_operand.vmem [shape: bf16[2,8,32], index: 2, kind: input, shape index: {}]
  %s3 = inlined_call_operand.vmem [shape: s32[2,1,8], index: 3, kind: input, shape index: {}]
  %s4 = inlined_call_operand.vmem [shape: bf16[4,32,8], index: 4, kind: input, shape index: {}]
  %s5 = inlined_call_operand.vmem [shape: f32[4,1,8], index: 5, kind: input, shape index: {}]
  %s6 = inlined_call_operand.vmem [shape: bf16[4,32,8], index: 6, kind: input, shape index: {}]
  %s7 = inlined_call_operand.vmem [shape: f32[4,1,8], index: 7, kind: input, shape index: {}]
  %s8 = inlined_call_operand.vmem [shape: bf16[4,32,8], index: 8, kind: input, shape index: {}]
  %s9 = inlined_call_operand.vmem [shape: f32[4,1,8], index: 9, kind: input, shape index: {}]
  %s10 = inlined_call_operand.vmem [shape: bf16[4,8,32], index: 10, kind: input, shape index: {}]
  %s11 = inlined_call_operand.vmem [shape: f32[1,32], index: 11, kind: input, shape index: {}]
  %s12 = inlined_call_operand.hbm [shape: f32[2,8,32], index: 12, kind: output, shape index: {}]
  %s13 = sld [smem:[#allocation0]]
  $region93: #{tpu_custom_call.1} parent=0
    _
  %s15 = ssub.s32 1, %s13
  %s16 = scalar_select 0, %s15, %s13
  $region1: #{tpu_custom_call.1} parent=0
    #allocation5 [shape = 'u8[8192]{0}', space=vmem, size = 0x2000, scoped, tag = 'output window, operand 0']
    #allocation6 [shape = 's32[2]{0}', space=sflag, size = 0x8, scoped, tag = 'scoped memory for tpu_custom_call.1']
    %17 = vsyncpa [#allocation6], 0
    %s18 = scalar_lea.sflag [#allocation6], 1
    %19 = vsyncpa %s18, 0
    loop: start=0, step=1, limit=10
    $region2: #{tpu_custom_call.1} parent=1 // loop_pre_header
      _
    $region3: #{tpu_custom_call.1} parent=1 // loop_header
      %s21 = sphi 0, %s25
      %p22 = scmp.ge.s32.totalorder %s21, 10
      %s28 = sphi 0, %s47
      %s29 = sphi 0, %s43
      %s30 = sphi 0, %s39
      %s31 = sphi 0, %s28
      %s32 = sphi 0, %s29
      %s33 = sphi 0, %s30
      %s34 = sphi 0, %s31
      %s35 = sphi 0, %s32
      %s36 = sphi 0, %s33
      %s52 = sphi 0, %s54
      %s55 = sphi 0, %s52
      %s56 = sphi 0, %s55
      %s72 = sphi 0, %s56
      %s78 = sphi 0, %s80
      %s81 = sphi 0, %s78
      %s82 = sphi 0, %s81
      %s98 = sphi 0, %s82
      %s104 = sphi 0, %s106
      %s107 = sphi 0, %s104
      %s108 = sphi 0, %s107
      %s124 = sphi 0, %s108
      %s130 = sphi 0, %s132
      %s133 = sphi 0, %s130
      %s134 = sphi 0, %s133
      %s150 = sphi 0, %s134
      %s154 = sphi 0, %s154
      %s156 = sphi 0, %s154
      %s157 = sphi 0, %s156
      %s171 = sphi 0, %s157
      %s175 = sphi 0, %s175
      %s177 = sphi 0, %s175
      %s178 = sphi 0, %s177
      %s192 = sphi 0, %s178
      %s196 = sphi 0, %s196
      %s198 = sphi 0, %s196
      %s199 = sphi 0, %s198
      %s213 = sphi 0, %s199
      %s217 = sphi 0, %s217
      %s219 = sphi 0, %s217
      %s220 = sphi 0, %s219
      %s234 = sphi 0, %s220
      %s238 = sphi 0, %s238
      %s240 = sphi 0, %s238
      %s241 = sphi 0, %s240
      %s255 = sphi 0, %s241
      %s259 = sphi 0, %s259
      %s261 = sphi 0, %s259
      %s262 = sphi 0, %s261
      %s276 = sphi 0, %s262
      %s280 = sphi 0, %s280
      %s282 = sphi 0, %s280
      %s283 = sphi 0, %s282
      %s297 = sphi 0, %s283
      %s301 = sphi 0, %s301
      %s303 = sphi 0, %s301
      %s304 = sphi 0, %s303
      %s318 = sphi 0, %s304
      %s326 = sphi 0, %s328
      %s329 = sphi 0, %s326
      %s330 = sphi 0, %s329
      %s346 = sphi 0, %s330
    $region4: #{tpu_custom_call.1} parent=1 // loop_header_branch
      %24 = sbr.rel (%p22) target = $region8
    $region5: #{tpu_custom_call.1} parent=1 // loop_body
      %s26 = ssub.s32 %s21, 1
      %s27 = ssub.s32 %s21, 2
      %s37 = sadd.s32 1, %s30
      %p38 = scmp.ge.s32.totalorder %s37, 4
      %s39 = scalar_select %p38, 0, %s37
      %s40 = sadd.s32 1, %s29
      %s41 = scalar_select %p38, %s40, %s29
      %p42 = scmp.ge.s32.totalorder %s41, 1
      %s43 = scalar_select %p42, 0, %s41
      %s44 = sadd.s32 1, %s28
      %s45 = scalar_select %p42, %s44, %s28
      %p46 = scmp.ge.s32.totalorder %s45, 2
      %s47 = scalar_select %p46, 0, %s45
      %s48 = ssub.s32 %s28, %s47
      %s49 = ssub.s32 %s29, %s43
      %s50 = sor.u32 %s48, %s49
      %p51 = scmp.eq.s32.totalorder %s50, 0
      %s53 = sadd.s32 %s52, 1
      %s54 = scalar_select %p51, %s52, %s53
      %p57 = pneg %p51
      %p58 = scmp.eq.s32.totalorder %s21, 7
      %p59 = por %p57, %p58
      %p60 = scmp.ne.s32.totalorder %s52, %s55
      %p61 = scmp.eq.s32.totalorder %s21, 0
      %p62 = por %p60, %p61
      %p63 = scmp.ne.s32.totalorder %s52, %s55
      %p64 = scmp.eq.s32.totalorder %s26, 7
      %p65 = por %p63, %p64
      %p66 = scmp.ne.s32.totalorder %s55, %s56
      %p67 = scmp.eq.s32.totalorder %s26, 0
      %p68 = por %p66, %p67
      %p69 = scmp.ne.s32.totalorder %s55, %s56
      %p70 = scmp.eq.s32.totalorder %s27, 7
      %p71 = por %p69, %p70
      %p73 = scmp.ne.s32.totalorder %s56, %s72
      %p74 = scmp.eq.s32.totalorder %s27, 0
      %p75 = por %p73, %p74
      %s76 = ssub.s32 %s28, %s47
      %p77 = scmp.eq.s32.totalorder %s76, 0
      %s79 = sadd.s32 %s78, 1
      %s80 = scalar_select %p77, %s78, %s79
      %p83 = pneg %p77
      %p84 = scmp.eq.s32.totalorder %s21, 7
      %p85 = por %p83, %p84
      %p86 = scmp.ne.s32.totalorder %s78, %s81
      %p87 = scmp.eq.s32.totalorder %s21, 0
      %p88 = por %p86, %p87
      %p89 = scmp.ne.s32.totalorder %s78, %s81
      %p90 = scmp.eq.s32.totalorder %s26, 7
      %p91 = por %p89, %p90
      %p92 = scmp.ne.s32.totalorder %s81, %s82
      %p93 = scmp.eq.s32.totalorder %s26, 0
      %p94 = por %p92, %p93
      %p95 = scmp.ne.s32.totalorder %s81, %s82
      %p96 = scmp.eq.s32.totalorder %s27, 7
      %p97 = por %p95, %p96
      %p99 = scmp.ne.s32.totalorder %s82, %s98
      %p100 = scmp.eq.s32.totalorder %s27, 0
      %p101 = por %p99, %p100
      %s102 = ssub.s32 %s28, %s47
      %p103 = scmp.eq.s32.totalorder %s102, 0
      %s105 = sadd.s32 %s104, 1
      %s106 = scalar_select %p103, %s104, %s105
      %p109 = pneg %p103
      %p110 = scmp.eq.s32.totalorder %s21, 7
      %p111 = por %p109, %p110
      %p112 = scmp.ne.s32.totalorder %s104, %s107
      %p113 = scmp.eq.s32.totalorder %s21, 0
      %p114 = por %p112, %p113
      %p115 = scmp.ne.s32.totalorder %s104, %s107
      %p116 = scmp.eq.s32.totalorder %s26, 7
      %p117 = por %p115, %p116
      %p118 = scmp.ne.s32.totalorder %s107, %s108
      %p119 = scmp.eq.s32.totalorder %s26, 0
      %p120 = por %p118, %p119
      %p121 = scmp.ne.s32.totalorder %s107, %s108
      %p122 = scmp.eq.s32.totalorder %s27, 7
      %p123 = por %p121, %p122
      %p125 = scmp.ne.s32.totalorder %s108, %s124
      %p126 = scmp.eq.s32.totalorder %s27, 0
      %p127 = por %p125, %p126
      %s128 = ssub.s32 %s28, %s47
      %p129 = scmp.eq.s32.totalorder %s128, 0
      %s131 = sadd.s32 %s130, 1
      %s132 = scalar_select %p129, %s130, %s131
      %p135 = pneg %p129
      %p136 = scmp.eq.s32.totalorder %s21, 7
      %p137 = por %p135, %p136
      %p138 = scmp.ne.s32.totalorder %s130, %s133
      %p139 = scmp.eq.s32.totalorder %s21, 0
      %p140 = por %p138, %p139
      %p141 = scmp.ne.s32.totalorder %s130, %s133
      %p142 = scmp.eq.s32.totalorder %s26, 7
      %p143 = por %p141, %p142
      %p144 = scmp.ne.s32.totalorder %s133, %s134
      %p145 = scmp.eq.s32.totalorder %s26, 0
      %p146 = por %p144, %p145
      %p147 = scmp.ne.s32.totalorder %s133, %s134
      %p148 = scmp.eq.s32.totalorder %s27, 7
      %p149 = por %p147, %p148
      %p151 = scmp.ne.s32.totalorder %s134, %s150
      %p152 = scmp.eq.s32.totalorder %s27, 0
      %p153 = por %p151, %p152
      %s155 = sadd.s32 %s154, 1
      %p158 = scmp.eq.s32.totalorder %s21, 7
      %p159 = scmp.ne.s32.totalorder %s154, %s156
      %p160 = scmp.eq.s32.totalorder %s21, 0
      %p161 = por %p159, %p160
      %p162 = scmp.ne.s32.totalorder %s154, %s156
      %p163 = scmp.eq.s32.totalorder %s26, 7
      %p164 = por %p162, %p163
      %p165 = scmp.ne.s32.totalorder %s156, %s157
      %p166 = scmp.eq.s32.totalorder %s26, 0
      %p167 = por %p165, %p166
      %p168 = scmp.ne.s32.totalorder %s156, %s157
      %p169 = scmp.eq.s32.totalorder %s27, 7
      %p170 = por %p168, %p169
      %p172 = scmp.ne.s32.totalorder %s157, %s171
      %p173 = scmp.eq.s32.totalorder %s27, 0
      %p174 = por %p172, %p173
      %s176 = sadd.s32 %s175, 1
      %p179 = scmp.eq.s32.totalorder %s21, 7
      %p180 = scmp.ne.s32.totalorder %s175, %s177
      %p181 = scmp.eq.s32.totalorder %s21, 0
      %p182 = por %p180, %p181
      %p183 = scmp.ne.s32.totalorder %s175, %s177
      %p184 = scmp.eq.s32.totalorder %s26, 7
      %p185 = por %p183, %p184
      %p186 = scmp.ne.s32.totalorder %s177, %s178
      %p187 = scmp.eq.s32.totalorder %s26, 0
      %p188 = por %p186, %p187
      %p189 = scmp.ne.s32.totalorder %s177, %s178
      %p190 = scmp.eq.s32.totalorder %s27, 7
      %p191 = por %p189, %p190
      %p193 = scmp.ne.s32.totalorder %s178, %s192
      %p194 = scmp.eq.s32.totalorder %s27, 0
      %p195 = por %p193, %p194
      %s197 = sadd.s32 %s196, 1
      %p200 = scmp.eq.s32.totalorder %s21, 7
      %p201 = scmp.ne.s32.totalorder %s196, %s198
      %p202 = scmp.eq.s32.totalorder %s21, 0
      %p203 = por %p201, %p202
      %p204 = scmp.ne.s32.totalorder %s196, %s198
      %p205 = scmp.eq.s32.totalorder %s26, 7
      %p206 = por %p204, %p205
      %p207 = scmp.ne.s32.totalorder %s198, %s199
      %p208 = scmp.eq.s32.totalorder %s26, 0
      %p209 = por %p207, %p208
      %p210 = scmp.ne.s32.totalorder %s198, %s199
      %p211 = scmp.eq.s32.totalorder %s27, 7
      %p212 = por %p210, %p211
      %p214 = scmp.ne.s32.totalorder %s199, %s213
      %p215 = scmp.eq.s32.totalorder %s27, 0
      %p216 = por %p214, %p215
      %s218 = sadd.s32 %s217, 1
      %p221 = scmp.eq.s32.totalorder %s21, 7
      %p222 = scmp.ne.s32.totalorder %s217, %s219
      %p223 = scmp.eq.s32.totalorder %s21, 0
      %p224 = por %p222, %p223
      %p225 = scmp.ne.s32.totalorder %s217, %s219
      %p226 = scmp.eq.s32.totalorder %s26, 7
      %p227 = por %p225, %p226
      %p228 = scmp.ne.s32.totalorder %s219, %s220
      %p229 = scmp.eq.s32.totalorder %s26, 0
      %p230 = por %p228, %p229
      %p231 = scmp.ne.s32.totalorder %s219, %s220
      %p232 = scmp.eq.s32.totalorder %s27, 7
      %p233 = por %p231, %p232
      %p235 = scmp.ne.s32.totalorder %s220, %s234
      %p236 = scmp.eq.s32.totalorder %s27, 0
      %p237 = por %p235, %p236
      %s239 = sadd.s32 %s238, 1
      %p242 = scmp.eq.s32.totalorder %s21, 7
      %p243 = scmp.ne.s32.totalorder %s238, %s240
      %p244 = scmp.eq.s32.totalorder %s21, 0
      %p245 = por %p243, %p244
      %p246 = scmp.ne.s32.totalorder %s238, %s240
      %p247 = scmp.eq.s32.totalorder %s26, 7
      %p248 = por %p246, %p247
      %p249 = scmp.ne.s32.totalorder %s240, %s241
      %p250 = scmp.eq.s32.totalorder %s26, 0
      %p251 = por %p249, %p250
      %p252 = scmp.ne.s32.totalorder %s240, %s241
      %p253 = scmp.eq.s32.totalorder %s27, 7
      %p254 = por %p252, %p253
      %p256 = scmp.ne.s32.totalorder %s241, %s255
      %p257 = scmp.eq.s32.totalorder %s27, 0
      %p258 = por %p256, %p257
      %s260 = sadd.s32 %s259, 1
      %p263 = scmp.eq.s32.totalorder %s21, 7
      %p264 = scmp.ne.s32.totalorder %s259, %s261
      %p265 = scmp.eq.s32.totalorder %s21, 0
      %p266 = por %p264, %p265
      %p267 = scmp.ne.s32.totalorder %s259, %s261
      %p268 = scmp.eq.s32.totalorder %s26, 7
      %p269 = por %p267, %p268
      %p270 = scmp.ne.s32.totalorder %s261, %s262
      %p271 = scmp.eq.s32.totalorder %s26, 0
      %p272 = por %p270, %p271
      %p273 = scmp.ne.s32.totalorder %s261, %s262
      %p274 = scmp.eq.s32.totalorder %s27, 7
      %p275 = por %p273, %p274
      %p277 = scmp.ne.s32.totalorder %s262, %s276
      %p278 = scmp.eq.s32.totalorder %s27, 0
      %p279 = por %p277, %p278
      %s281 = sadd.s32 %s280, 1
      %p284 = scmp.eq.s32.totalorder %s21, 7
      %p285 = scmp.ne.s32.totalorder %s280, %s282
      %p286 = scmp.eq.s32.totalorder %s21, 0
      %p287 = por %p285, %p286
      %p288 = scmp.ne.s32.totalorder %s280, %s282
      %p289 = scmp.eq.s32.totalorder %s26, 7
      %p290 = por %p288, %p289
      %p291 = scmp.ne.s32.totalorder %s282, %s283
      %p292 = scmp.eq.s32.totalorder %s26, 0
      %p293 = por %p291, %p292
      %p294 = scmp.ne.s32.totalorder %s282, %s283
      %p295 = scmp.eq.s32.totalorder %s27, 7
      %p296 = por %p294, %p295
      %p298 = scmp.ne.s32.totalorder %s283, %s297
      %p299 = scmp.eq.s32.totalorder %s27, 0
      %p300 = por %p298, %p299
      %s302 = sadd.s32 %s301, 1
      %p305 = scmp.eq.s32.totalorder %s21, 7
      %p306 = scmp.ne.s32.totalorder %s301, %s303
      %p307 = scmp.eq.s32.totalorder %s21, 0
      %p308 = por %p306, %p307
      %p309 = scmp.ne.s32.totalorder %s301, %s303
      %p310 = scmp.eq.s32.totalorder %s26, 7
      %p311 = por %p309, %p310
      %p312 = scmp.ne.s32.totalorder %s303, %s304
      %p313 = scmp.eq.s32.totalorder %s26, 0
      %p314 = por %p312, %p313
      %p315 = scmp.ne.s32.totalorder %s303, %s304
      %p316 = scmp.eq.s32.totalorder %s27, 7
      %p317 = por %p315, %p316
      %p319 = scmp.ne.s32.totalorder %s304, %s318
      %p320 = scmp.eq.s32.totalorder %s27, 0
      %p321 = por %p319, %p320
      %s322 = ssub.s32 %s28, %s47
      %s323 = ssub.s32 %s29, %s43
      %s324 = sor.u32 %s322, %s323
      %p325 = scmp.eq.s32.totalorder %s324, 0
      %s327 = sadd.s32 %s326, 1
      %s328 = scalar_select %p325, %s326, %s327
      %p331 = pneg %p325
      %p332 = scmp.eq.s32.totalorder %s21, 7
      %p333 = por %p331, %p332
      %p334 = scmp.ne.s32.totalorder %s326, %s329
      %p335 = scmp.eq.s32.totalorder %s21, 0
      %p336 = por %p334, %p335
      %p337 = scmp.ne.s32.totalorder %s326, %s329
      %p338 = scmp.eq.s32.totalorder %s26, 7
      %p339 = por %p337, %p338
      %p340 = scmp.ne.s32.totalorder %s329, %s330
      %p341 = scmp.eq.s32.totalorder %s26, 0
      %p342 = por %p340, %p341
      %p343 = scmp.ne.s32.totalorder %s329, %s330
      %p344 = scmp.eq.s32.totalorder %s27, 7
      %p345 = por %p343, %p344
      %p347 = scmp.ne.s32.totalorder %s330, %s346
      %p348 = scmp.eq.s32.totalorder %s27, 0
      %p349 = por %p347, %p348
      %p350 = scmp.le.s32.totalorder 1, %s21
      %p351 = scmp.lt.s32.totalorder %s21, 9
      %p352 = pnand %p350, %p351
      %p353 = pneg %p352
      // Predicated region
      $region9: #{tpu_custom_call.1} parent=5 // pred_check
        _
      $region10: #{tpu_custom_call.1} parent=5 // pred_check_branch
        %355 = sbr.rel (%p352) target = $region12
      $region11: #{tpu_custom_call.1} parent=5 // pred_region
        %s356 = ssub.s32 %s21, 1
        // Predicated region
        $region13: #{tpu_custom_call.1} parent=11 // pred_check
          %p357 = pneg %p167
        $region14: #{tpu_custom_call.1} parent=11 // pred_check_branch
          %359 = sbr.rel (%p357) target = $region16
        $region15: #{tpu_custom_call.1} parent=11 // pred_region
          _
        $region16: #{tpu_custom_call.1} parent=11 // pred_fallthru
          _
        // Predicated region
        $region17: #{tpu_custom_call.1} parent=11 // pred_check
          %p360 = pneg %p188
        $region18: #{tpu_custom_call.1} parent=11 // pred_check_branch
          %362 = sbr.rel (%p360) target = $region20
        $region19: #{tpu_custom_call.1} parent=11 // pred_region
          _
        $region20: #{tpu_custom_call.1} parent=11 // pred_fallthru
          _
        // Predicated region
        $region21: #{tpu_custom_call.1} parent=11 // pred_check
          %p363 = pneg %p209
        $region22: #{tpu_custom_call.1} parent=11 // pred_check_branch
          %365 = sbr.rel (%p363) target = $region24
        $region23: #{tpu_custom_call.1} parent=11 // pred_region
          _
        $region24: #{tpu_custom_call.1} parent=11 // pred_fallthru
          _
        // Predicated region
        $region25: #{tpu_custom_call.1} parent=11 // pred_check
          %p366 = pneg %p230
        $region26: #{tpu_custom_call.1} parent=11 // pred_check_branch
          %368 = sbr.rel (%p366) target = $region28
        $region27: #{tpu_custom_call.1} parent=11 // pred_region
          _
        $region28: #{tpu_custom_call.1} parent=11 // pred_fallthru
          _
        // Predicated region
        $region29: #{tpu_custom_call.1} parent=11 // pred_check
          %p369 = pneg %p251
        $region30: #{tpu_custom_call.1} parent=11 // pred_check_branch
          %371 = sbr.rel (%p369) target = $region32
        $region31: #{tpu_custom_call.1} parent=11 // pred_region
          _
        $region32: #{tpu_custom_call.1} parent=11 // pred_fallthru
          _
        // Predicated region
        $region33: #{tpu_custom_call.1} parent=11 // pred_check
          %p372 = pneg %p272
        $region34: #{tpu_custom_call.1} parent=11 // pred_check_branch
          %374 = sbr.rel (%p372) target = $region36
        $region35: #{tpu_custom_call.1} parent=11 // pred_region
          _
        $region36: #{tpu_custom_call.1} parent=11 // pred_fallthru
          _
        // Predicated region
        $region37: #{tpu_custom_call.1} parent=11 // pred_check
          %p375 = pneg %p293
        $region38: #{tpu_custom_call.1} parent=11 // pred_check_branch
          %377 = sbr.rel (%p375) target = $region40
        $region39: #{tpu_custom_call.1} parent=11 // pred_region
          _
        $region40: #{tpu_custom_call.1} parent=11 // pred_fallthru
          _
        // Predicated region
        $region41: #{tpu_custom_call.1} parent=11 // pred_check
          %p378 = pneg %p314
        $region42: #{tpu_custom_call.1} parent=11 // pred_check_branch
          %380 = sbr.rel (%p378) target = $region44
        $region43: #{tpu_custom_call.1} parent=11 // pred_region
          _
        $region44: #{tpu_custom_call.1} parent=11 // pred_fallthru
          _
      $region12: #{tpu_custom_call.1} parent=5 // pred_fallthru
        _
      %p381 = scmp.lt.s32.totalorder %s21, 8
      // Predicated region
      $region45: #{tpu_custom_call.1} parent=5 // pred_check
        %p382 = pneg %p381
      $region46: #{tpu_custom_call.1} parent=5 // pred_check_branch
        %384 = sbr.rel (%p382) target = $region48
      $region47: #{tpu_custom_call.1} parent=5 // pred_region
        // Predicated region
        $region49: #{tpu_custom_call.1} parent=47 // pred_check
          %p385 = pneg %p62
        $region50: #{tpu_custom_call.1} parent=47 // pred_check_branch
          %387 = sbr.rel (%p385) target = $region52
        $region51: #{tpu_custom_call.1} parent=47 // pred_region
          %p388 = scmp.lt.s32.totalorder %s28, 1
          %s389 = scalar_select %p388, %s28, 1
          %p390 = scmp.lt.s32.totalorder %s29, 0
          %s391 = scalar_select %p390, %s29, 0
          %s392 = sadd.s32 %s391, %s389
          %s393 = smul.addr %s392, 4
          %s394 = scalar_lea.vmem %s0, %s393
        $region52: #{tpu_custom_call.1} parent=47 // pred_fallthru
          _
        // Predicated region
        $region53: #{tpu_custom_call.1} parent=47 // pred_check
          %p395 = pneg %p88
        $region54: #{tpu_custom_call.1} parent=47 // pred_check_branch
          %397 = sbr.rel (%p395) target = $region56
        $region55: #{tpu_custom_call.1} parent=47 // pred_region
          %p398 = scmp.lt.s32.totalorder %s28, 1
          %s399 = scalar_select %p398, %s28, 1
          %s400 = smul.addr %s399, 4
          %s401 = scalar_lea.vmem %s1, %s400
        $region56: #{tpu_custom_call.1} parent=47 // pred_fallthru
          _
        // Predicated region
        $region57: #{tpu_custom_call.1} parent=47 // pred_check
          %p402 = pneg %p114
        $region58: #{tpu_custom_call.1} parent=47 // pred_check_branch
          %404 = sbr.rel (%p402) target = $region60
        $region59: #{tpu_custom_call.1} parent=47 // pred_region
          %p405 = scmp.lt.s32.totalorder %s28, 1
          %s406 = scalar_select %p405, %s28, 1
          %s407 = smul.addr %s406, 4
          %s408 = scalar_lea.vmem %s2, %s407
        $region60: #{tpu_custom_call.1} parent=47 // pred_fallthru
          _
        // Predicated region
        $region61: #{tpu_custom_call.1} parent=47 // pred_check
          %p409 = pneg %p140
        $region62: #{tpu_custom_call.1} parent=47 // pred_check_branch
          %411 = sbr.rel (%p409) target = $region64
        $region63: #{tpu_custom_call.1} parent=47 // pred_region
          %p412 = scmp.lt.s32.totalorder %s28, 1
          %s413 = scalar_select %p412, %s28, 1
          %s414 = scalar_lea.vmem %s3, %s413
        $region64: #{tpu_custom_call.1} parent=47 // pred_fallthru
          _
      $region48: #{tpu_custom_call.1} parent=5 // pred_fallthru
        _
      %p415 = scmp.le.s32.totalorder 1, %s21
      %p416 = scmp.lt.s32.totalorder %s21, 9
      %p417 = pnand %p415, %p416
      %p418 = pneg %p417
      // Predicated region
      $region65: #{tpu_custom_call.1} parent=5 // pred_check
        _
      $region66: #{tpu_custom_call.1} parent=5 // pred_check_branch
        %420 = sbr.rel (%p417) target = $region68
      $region67: #{tpu_custom_call.1} parent=5 // pred_region
        %s421 = ssub.s32 %s21, 1
        %p422 = scmp.lt.s32.totalorder %s31, 1
        %s423 = scalar_select %p422, %s31, 1
        %p424 = scmp.lt.s32.totalorder %s32, 0
        %s425 = scalar_select %p424, %s32, 0
        %s426 = sadd.s32 %s425, %s423
        %s427 = smul.addr %s426, 4
        %s428 = scalar_lea.vmem %s0, %s427
        %p429 = pneg %p68
        %p430 = pneg %p65
        %p431 = scmp.lt.s32.totalorder %s31, 1
        %s432 = scalar_select %p431, %s31, 1
        %s433 = smul.addr %s432, 4
        %s434 = scalar_lea.vmem %s1, %s433
        %p435 = pneg %p94
        %p436 = pneg %p91
        %p437 = scmp.lt.s32.totalorder %s31, 1
        %s438 = scalar_select %p437, %s31, 1
        %s439 = smul.addr %s438, 4
        %s440 = scalar_lea.vmem %s2, %s439
        %p441 = pneg %p120
        %p442 = pneg %p117
        %p443 = scmp.lt.s32.totalorder %s31, 1
        %s444 = scalar_select %p443, %s31, 1
        %s445 = scalar_lea.vmem %s3, %s444
        %p446 = pneg %p146
        %p447 = pneg %p143
        %p448 = pneg %p167
        %p449 = pneg %p164
        %p450 = pneg %p188
        %p451 = pneg %p185
        %p452 = pneg %p209
        %p453 = pneg %p206
        %p454 = pneg %p230
        %p455 = pneg %p227
        %p456 = pneg %p251
        %p457 = pneg %p248
        %p458 = pneg %p272
        %p459 = pneg %p269
        %p460 = pneg %p293
        %p461 = pneg %p290
        %p462 = pneg %p314
        %p463 = pneg %p311
        %p464 = pneg %p342
        %p465 = pneg %p339
        %s466 = sand.u32 %s329, 1
        %s467 = scalar_lea.sflag [#allocation6], %s466
        %s468 = sand.u32 %s329, 1
        %s469 = smul.addr %s468, 8
        %s470 = scalar_lea.vmem [#allocation5], %s469
        %p471 = scmp.lt.s32.totalorder %s31, 1
        %s472 = scalar_select %p471, %s31, 1
        %p473 = scmp.lt.s32.totalorder %s32, 0
        %s474 = scalar_select %p473, %s32, 0
        %s475 = sadd.s32 %s474, %s472
        %s476 = smul.addr %s475, 4
        %s477 = scalar_lea.vmem %s0, %s476
        %p478 = scmp.lt.s32.totalorder %s31, 1
        %s479 = scalar_select %p478, %s31, 1
        %s480 = smul.addr %s479, 4
        %s481 = scalar_lea.vmem %s1, %s480
        %p482 = scmp.lt.s32.totalorder %s31, 1
        %s483 = scalar_select %p482, %s31, 1
        %s484 = smul.addr %s483, 4
        %s485 = scalar_lea.vmem %s2, %s484
        %p486 = scmp.lt.s32.totalorder %s31, 1
        %s487 = scalar_select %p486, %s31, 1
        %s488 = scalar_lea.vmem %s3, %s487
        %p490 = scmp.eq.s32.totalorder %s33, 0
        // Predicated region
        $region69: #{tpu_custom_call.1} parent=67 // pred_check
          %p491 = pneg %p490
        $region70: #{tpu_custom_call.1} parent=67 // pred_check_branch
          %493 = sbr.rel (%p491) target = $region72
        $region71: #{tpu_custom_call.1} parent=67 // pred_region
          %vm494 = vcmask 261120
          %495 = vst.msk [vmem:[#allocation2] sm:$0xff] %vm494, 0.0
        $region72: #{tpu_custom_call.1} parent=67 // pred_fallthru
          _
        %p496 = scmp.eq.s32.totalorder %s32, 0
        // Predicated region
        $region73: #{tpu_custom_call.1} parent=67 // pred_check
          %p497 = pneg %p496
        $region74: #{tpu_custom_call.1} parent=67 // pred_check_branch
          %499 = sbr.rel (%p497) target = $region76
        $region75: #{tpu_custom_call.1} parent=67 // pred_region
          %v500 = vld [vmem:[%s481] sm:$0xf]
          %v501 = vld [vmem:[%s485] sm:$0xf]
          %s502 = smul.u32 %s33, 4
          %s503 = smul.addr %s502, 4
          %s504 = scalar_lea.vmem %s6, %s503
          %v505 = vld [vmem:[%s504] sm:$0xf]
          %v506 = vld [vmem:[%s504 + $0x4] sm:$0xf]
          %v507 = vld [vmem:[%s504 + $0x8] sm:$0xf]
          %v508 = vld [vmem:[%s504 + $0xc] sm:$0xf]
          %s509 = scalar_lea.vmem %s7, %s33
          %v510 = vld [vmem:[%s509] sm:$0x1]
          %v512 = vperm.slane %v510, 0
          %v518 = vunpack.c.l.b16 %v505
          %v519 = vunpack.c.l.b16 %v506
          %v520 = vunpack.c.l.b16 %v507
          %v521 = vunpack.c.l.b16 %v508
          %v522 = vpack.c.b16 %v519, %v518
          %v523 = vpack.c.b16 %v521, %v520
          %vm526 = vcmask 261120
          %v528 = vsel %vm526, %v500, 0
          %530 = vmatpush.bf16.msra.mxu0 0
          %531 = vmatpush.bf16.msra.mxu0 0
          %532 = vmatpush.bf16.msra.mxu0 0
          %533 = vmatpush.bf16.msra.mxu0 0
          %534 = vmatpush.bf16.msra.mxu0 0
          %535 = vmatpush.bf16.msra.mxu0 0
          %536 = vmatpush.bf16.msra.mxu0 %v523
          %537 = vmatpush.bf16.msra.mxu0 %v522
          %538 = vmatmul.bf16.gmra.mxu0 %v528
          %v539 = vpop.f32.mrf.mxu0
          %v540 = vadd.f32 %v512, %v539
          %v541 = vpop.f32.mrf.mxu0
          %542 = vdwg.mxu0
          %s543 = smul.addr %s502, 4
          %s544 = scalar_lea.vmem %s8, %s543
          %v545 = vld [vmem:[%s544] sm:$0xf]
          %v546 = vld [vmem:[%s544 + $0x4] sm:$0xf]
          %v547 = vld [vmem:[%s544 + $0x8] sm:$0xf]
          %v548 = vld [vmem:[%s544 + $0xc] sm:$0xf]
          %s549 = scalar_lea.vmem %s9, %s33
          %v550 = vld [vmem:[%s549] sm:$0x1]
          %v552 = vperm.slane %v550, 0
          %v558 = vunpack.c.l.b16 %v545
          %v559 = vunpack.c.l.b16 %v546
          %v560 = vunpack.c.l.b16 %v547
          %v561 = vunpack.c.l.b16 %v548
          %v562 = vpack.c.b16 %v559, %v558
          %v563 = vpack.c.b16 %v561, %v560
          %v567 = vsel %vm526, %v501, 0
          %569 = vmatpush.bf16.msra.mxu0 0
          %570 = vmatpush.bf16.msra.mxu0 0
          %571 = vmatpush.bf16.msra.mxu0 0
          %572 = vmatpush.bf16.msra.mxu0 0
          %573 = vmatpush.bf16.msra.mxu0 0
          %574 = vmatpush.bf16.msra.mxu0 0
          %575 = vmatpush.bf16.msra.mxu0 %v563
          %576 = vmatpush.bf16.msra.mxu0 %v562
          %577 = vmatmul.bf16.gmra.mxu0 %v567
          %v578 = vpop.f32.mrf.mxu0
          %v579 = vadd.f32 %v552, %v578
          %v580 = vpop.f32.mrf.mxu0
          %581 = vdwg.mxu0
          %v582 = vpack.c.bf16 %v540, %v540
          %s583 = smul.addr %s33, 4
          %s584 = scalar_lea.vmem [#allocation3], %s583
          %vm585 = vcmask 60416
          %586 = vst.msk [vmem:[%s584] sm:$0xf] %vm585, %v582
          %v587 = vpack.c.bf16 %v579, %v579
          %s588 = smul.addr %s33, 4
          %s589 = scalar_lea.vmem [#allocation4], %s588
          %590 = vst.msk [vmem:[%s589] sm:$0xf] %vm585, %v587
        $region76: #{tpu_custom_call.1} parent=67 // pred_fallthru
          _
        %v591 = vld [vmem:[%s477] sm:$0xf]
        %s592 = smul.u32 %s33, 4
        %s593 = smul.addr %s592, 4
        %s594 = scalar_lea.vmem %s4, %s593
        %v595 = vld [vmem:[%s594] sm:$0xf]
        %v596 = vld [vmem:[%s594 + $0x4] sm:$0xf]
        %v597 = vld [vmem:[%s594 + $0x8] sm:$0xf]
        %v598 = vld [vmem:[%s594 + $0xc] sm:$0xf]
        %s599 = scalar_lea.vmem %s5, %s33
        %v600 = vld [vmem:[%s599] sm:$0x1]
        %v602 = vperm.slane %v600, 0
        %v608 = vunpack.c.l.b16 %v595
        %v609 = vunpack.c.l.b16 %v596
        %v610 = vunpack.c.l.b16 %v597
        %v611 = vunpack.c.l.b16 %v598
        %v612 = vpack.c.b16 %v609, %v608
        %v613 = vpack.c.b16 %v611, %v610
        %vm616 = vcmask 261120
        %v618 = vsel %vm616, %v591, 0
        %620 = vmatpush.bf16.msra.mxu0 0
        %621 = vmatpush.bf16.msra.mxu0 0
        %622 = vmatpush.bf16.msra.mxu0 0
        %623 = vmatpush.bf16.msra.mxu0 0
        %624 = vmatpush.bf16.msra.mxu0 0
        %625 = vmatpush.bf16.msra.mxu0 0
        %626 = vmatpush.bf16.msra.mxu0 %v613
        %627 = vmatpush.bf16.msra.mxu0 %v612
        %628 = vmatmul.bf16.gmra.mxu0 %v618
        %v629 = vpop.f32.mrf.mxu0
        %v630 = vadd.f32 %v602, %v629
        %v631 = vpop.f32.mrf.mxu0
        %632 = vdwg.mxu0
        %v633 = vmul.f32 %v630, 0.35355338
        %s634 = smul.addr %s33, 4
        %s635 = scalar_lea.vmem [#allocation3], %s634
        %v636 = vld [vmem:[%s635] sm:$0xf]
        %s637 = smul.addr %s33, 4
        %s638 = scalar_lea.vmem [#allocation4], %s637
        %v639 = vld [vmem:[%s638] sm:$0xf]
        %v640 = vpack.c.bf16 %v633, %v633
        %vm641 = vcmask 64512
        %v643 = vsel %vm641, %v640, 0
        %v646 = vsel %vm641, %v636, 0
        %648 = vmatpush.bf16.xpose.msra.mxu0 0
        %649 = vmatpush.bf16.xpose.msra.mxu0 0
        %650 = vmatpush.bf16.xpose.msra.mxu0 0
        %651 = vmatpush.bf16.xpose.msra.mxu0 0
        %652 = vmatpush.bf16.xpose.msra.mxu0 0
        %653 = vmatpush.bf16.xpose.msra.mxu0 0
        %654 = vmatpush.bf16.xpose.msra.mxu0 0
        %655 = vmatpush.bf16.xpose.msra.mxu0 %v646
        %656 = vmatmul.bf16.gmra.mxu0 %v643
        %v657 = vpop.f32.mrf.mxu0
        %v658 = vadd.f32 0.0, %v657
        %v659 = vpop.f32.mrf.mxu0
        %660 = vdwg.mxu0
        %v661 = vld [vmem:[%s488] sm:$0x1]
        %vm662 = vcmp.eq.s32.totalorder %v661, 0
        %v663 = vsel %vm662, 1, 0
        %v664 = vperm.slane %v663, 0
        %vm665 = vcmp.eq.s32.totalorder %v664, 1
        %v666 = vsel %vm665, -3.4028235e+38, %v658
        %v667 = vsel %vm641, %v666, -inf
        %668 = vmax.xlane.f32.xlu0 %v667
        %v669 = vpop.xlane.xlu0 %668
        %v670 = vsub.f32 %v666, %v669
        %v671 = vmul.f32 %v670, 1.442695
        %v672 = vpow.pop %v671
        %v673 = vsel %vm641, %v672, 0.0
        %674 = vadd.xlane.f32.xlu0 %v673
        %v675 = vpop.xlane.xlu0 %674
        %v676 = vsel %vm665, 0.0, %v672
        %v677 = vpack.c.bf16 %v676, %v676
        %v679 = vsel %vm641, %v677, 0
        %vm681 = vcmask 1043456
        %v683 = vsel %vm681, %v639, 0
        %685 = vmatpush.bf16.msra.mxu0 0
        %686 = vmatpush.bf16.msra.mxu0 0
        %687 = vmatpush.bf16.msra.mxu0 0
        %688 = vmatpush.bf16.msra.mxu0 0
        %689 = vmatpush.bf16.msra.mxu0 0
        %690 = vmatpush.bf16.msra.mxu0 0
        %691 = vmatpush.bf16.msra.mxu0 0
        %692 = vmatpush.bf16.msra.mxu0 %v683
        %693 = vmatmul.bf16.gmra.mxu0 %v679
        %v694 = vpop.f32.mrf.mxu0
        %v695 = vadd.f32 0.0, %v694
        %v696 = vpop.f32.mrf.mxu0
        %697 = vdwg.mxu0
        %v698 = vrcp.pop %v675
        %v699 = vmul.f32 %v695, %v698
        %v700 = vld [vmem:[#allocation2] sm:$0xff]
        %v701 = vpack.c.bf16 %v699, %v699
        %s702 = smul.addr %s33, 4
        %s703 = scalar_lea.vmem %s10, %s702
        %v704 = vld [vmem:[%s703] sm:$0xf]
        %v706 = vsel %vm641, %v701, 0
        %v709 = vsel %vm681, %v704, 0
        %711 = vmatpush.bf16.msra.mxu0 0
        %712 = vmatpush.bf16.msra.mxu0 0
        %713 = vmatpush.bf16.msra.mxu0 0
        %714 = vmatpush.bf16.msra.mxu0 0
        %715 = vmatpush.bf16.msra.mxu0 0
        %716 = vmatpush.bf16.msra.mxu0 0
        %717 = vmatpush.bf16.msra.mxu0 0
        %718 = vmatpush.bf16.msra.mxu0 %v709
        %719 = vmatmul.bf16.gmra.mxu0 %v706
        %v720 = vpop.f32.mrf.mxu0
        %v721 = vadd.f32 0.0, %v720
        %v722 = vpop.f32.mrf.mxu0
        %723 = vdwg.mxu0
        %v724 = vadd.f32 %v700, %v721
        %725 = vst.msk [vmem:[#allocation2] sm:$0xff] %vm616, %v724
        %p726 = scmp.eq.s32.totalorder %s33, 3
        // Predicated region
        $region77: #{tpu_custom_call.1} parent=67 // pred_check
          %p727 = pneg %p726
        $region78: #{tpu_custom_call.1} parent=67 // pred_check_branch
          %729 = sbr.rel (%p727) target = $region80
        $region79: #{tpu_custom_call.1} parent=67 // pred_region
          %v730 = vld [vmem:[#allocation2] sm:$0xff]
          %v731 = vld [vmem:[%s11] sm:$0x1]
          %v733 = vperm.slane %v731, 0
          %v735 = vadd.f32 %v730, %v733
          %736 = vst.msk [vmem:[%s470] sm:$0xff] %vm616, %v735
        $region80: #{tpu_custom_call.1} parent=67 // pred_fallthru
          _
        %s737 = sand.u32 %s329, 1
        %s738 = scalar_lea.sflag [#allocation6], %s737
        %s739 = sand.u32 %s329, 1
        %s740 = smul.addr %s739, 8
        %s741 = scalar_lea.vmem [#allocation5], %s740
        // Predicated region
        $region81: #{tpu_custom_call.1} parent=67 // pred_check
          %p742 = pneg %p339
        $region82: #{tpu_custom_call.1} parent=67 // pred_check_branch
          %744 = sbr.rel (%p742) target = $region84
        $region83: #{tpu_custom_call.1} parent=67 // pred_region
          %746 = vsyncadd %s738, 0
          %s747 = sadd.s32 %s32, %s31
          %s748 = smul.addr %s747, 8
          %s749 = scalar_lea.hbm %s12, %s748
          %s751 = sshll.u32 %s741, 4
          %s752 = int_to_ptr.vmem [resolvable:$true] %s751
          %s753 = sshll.u32 %s749, 4
          %s754 = int_to_ptr.hbm [resolvable:$true] %s753
          %756 = dma.vmem_to_hbm [thread:$0]  %s752, 128, %s754, %s738
        $region84: #{tpu_custom_call.1} parent=67 // pred_fallthru
          _
      $region68: #{tpu_custom_call.1} parent=5 // pred_fallthru
        _
      %p757 = scmp.le.s32.totalorder 2, %s21
      // Predicated region
      $region85: #{tpu_custom_call.1} parent=5 // pred_check
        %p758 = pneg %p757
      $region86: #{tpu_custom_call.1} parent=5 // pred_check_branch
        %760 = sbr.rel (%p758) target = $region88
      $region87: #{tpu_custom_call.1} parent=5 // pred_region
        %s761 = ssub.s32 %s21, 2
        // Predicated region
        $region89: #{tpu_custom_call.1} parent=87 // pred_check
          %p762 = pneg %p345
        $region90: #{tpu_custom_call.1} parent=87 // pred_check_branch
          %764 = sbr.rel (%p762) target = $region92
        $region91: #{tpu_custom_call.1} parent=87 // pred_region
          %s765 = sand.u32 %s330, 1
          %s766 = scalar_lea.sflag [#allocation6], %s765
          %s767 = sand.u32 %s330, 1
          %s768 = smul.addr %s767, 8
          %s769 = scalar_lea.vmem [#allocation5], %s768
          %771 = dma.done %s766, 128
        $region92: #{tpu_custom_call.1} parent=87 // pred_fallthru
          _
      $region88: #{tpu_custom_call.1} parent=5 // pred_fallthru
        _
    $region6: #{tpu_custom_call.1} parent=1 // loop_footer
      %s25 = sadd.s32 1, %s21
    $region7: #{tpu_custom_call.1} parent=1 // loop_footer_branch
      %20 = sbr.rel target = $region3
    $region8: #{tpu_custom_call.1} parent=1 // loop_exit
      _
    %772 = vsyncpa [#allocation6], 1
    %s773 = scalar_lea.sflag [#allocation6], 1
    %774 = vsyncpa %s773, 1

</llo_original>
